<compile_context>
chip_gen: v6e
topology: v6e:2x2x1
jax: 0.10.0
libtpu: 0.0.40
codegen_flags: <defaults>
</compile_context>

<pallas_src>
import functools

import jax
import jax.numpy as jnp
from jax import lax
from jax.experimental import pallas as pl
from jax.experimental.pallas import tpu as pltpu

_LANE = 128
# 2 MiB per block; with (in + out) x double-buffering that is ~8 MiB of VMEM,
# which fits every generation's scoped default (v5e 16 MiB, v6e/v7x 32 MiB).
_TARGET_BLOCK_BYTES = 2 << 20


def _normalize_kernel(x_ref, o_ref, *, power):
    # x_ref block: (TB, C, T_HW) -- full channel extent, a tile of batch/space.
    x = x_ref[...]
    xf = x.astype(jnp.float32)  # reduce in f32 (v5e has no bf16 VPU/EUP path)
    if power == 2:
        s = jnp.sum(xf * xf, axis=1, keepdims=True)        # (TB, 1, T_HW)
        inv = lax.rsqrt(s)                                  # EUP work on 1/C of data
    else:
        # General p, matching the module exactly (no abs, no eps).
        s = jnp.sum(xf ** power, axis=1, keepdims=True)
        inv = s ** (-1.0 / power)
    # Broadcast-multiply in the input dtype: skips a full-tile f32 round trip
    # for bf16 inputs (bf16 VALU on v6e/v7x); identical math for f32 inputs.
    o_ref[...] = (x * inv.astype(x.dtype)).astype(o_ref.dtype)


def _choose_tiles(B, C, HW, itemsize):
    """Pick (batch_tile, spatial_tile) that keep blocks lane-dense & VMEM-small."""
    # Spatial tile: largest multiple of 128 that divides HW and fits the budget.
    if HW % _LANE == 0:
        max_lanes = max(_LANE, _TARGET_BLOCK_BYTES // max(1, C * itemsize))
        t_hw = _LANE
        t = _LANE
        while t <= HW:
            if HW % t == 0 and t <= max_lanes:
                t_hw = t
            t += _LANE
    else:
        # Ragged spatial extent: take the full dim (block dim == array dim is
        # always legal); stores stay unmasked because it is the full extent.
        t_hw = HW
    # Batch fold: amortize per-grid-step overhead / fill sublanes when C is
    # small, while staying inside the per-block byte budget.
    t_b = 1
    for tb in range(1, B + 1):
        if B % tb == 0 and tb * C * t_hw * itemsize <= _TARGET_BLOCK_BYTES:
            t_b = tb
    return t_b, t_hw


def normalize(x, power=2):
    """x: (B, C, H, W) NCHW.  Returns x / (sum_c x^p)^(1/p), like the module."""
    B, C, H, W = x.shape
    HW = H * W
    x3 = x.reshape(B, C, HW)
    itemsize = jnp.dtype(x.dtype).itemsize

    # Keep integer powers on the integer_pow path (avoids exp/log chains and
    # spurious NaNs for negative inputs with p=2.0 etc.).
    if isinstance(power, float) and power.is_integer():
        power = int(power)

    t_b, t_hw = _choose_tiles(B, C, HW, itemsize)
    grid = (B // t_b, HW // t_hw)

    kernel = functools.partial(_normalize_kernel, power=power)

    out = pl.pallas_call(
        kernel,
        out_shape=jax.ShapeDtypeStruct((B, C, HW), x.dtype),
        grid_spec=pltpu.PrefetchScalarGridSpec(
            num_scalar_prefetch=0,
            grid=grid,
            in_specs=[pl.BlockSpec((t_b, C, t_hw), lambda b, s: (b, 0, s))],
            out_specs=pl.BlockSpec((t_b, C, t_hw), lambda b, s: (b, 0, s)),
        ),
        compiler_params=pltpu.CompilerParams(
            dimension_semantics=("parallel", "parallel"),
        ),
        cost_estimate=pl.CostEstimate(
            flops=3 * B * C * HW,                 # square + sum + scale
            transcendentals=B * HW,               # one rsqrt per (b, hw)
            bytes_accessed=2 * B * C * HW * itemsize,
        ),
    )(x3)

    return out.reshape(B, C, H, W)


if __name__ == "__main__":
    key = jax.random.PRNGKey(0)
    # Small shapes consistent with a conv-feature input: batch=2, channels=4,
    # spatial=16x16.
    x = jax.random.normal(key, (2, 4, 16, 16), dtype=jnp.float32)

    out = normalize(x, power=2)
    out = jax.block_until_ready(out)

    # Reference check in plain JAX (mirrors the PyTorch forward exactly).
    norm_ref = jnp.sum(x ** 2, axis=1, keepdims=True) ** 0.5
    ref = x / norm_ref
    assert out.shape == x.shape and out.dtype == x.dtype
    assert jnp.allclose(out, ref, atol=1e-5, rtol=1e-5)

    print("KERNEL_OK")
</pallas_src>

<mosaic_0001>
module attributes {stable_mosaic.version = 11 : i64} {
  func.func @_normalize_kernel(%arg0: i32, %arg1: i32, %arg2: memref<2x4x256xf32, #tpu.memory_space<vmem>>, %arg3: memref<2x4x256xf32, #tpu.memory_space<vmem>>) attributes {dimension_semantics = [#tpu.dimension_semantics<parallel>, #tpu.dimension_semantics<parallel>], iteration_bounds = array<i64: 1, 1>, scalar_prefetch = 0 : i64, scratch_operands = 0 : i64, tpu.core_type = #tpu.core_type<tc>, window_params = [{transform_indices = @transform_0, window_bounds = array<i64: 2, 4, 256>}, {transform_indices = @transform_1, window_bounds = array<i64: 2, 4, 256>}]} {
    %c0 = arith.constant 0 : index
    %c0_0 = arith.constant 0 : index
    %c0_1 = arith.constant 0 : index
    %0 = vector.load %arg2[%c0, %c0_0, %c0_1] : memref<2x4x256xf32, #tpu.memory_space<vmem>>, vector<2x4x256xf32>
    %1 = arith.mulf %0, %0 : vector<2x4x256xf32>
    %cst = arith.constant dense<0.000000e+00> : vector<2x256xf32>
    %2 = vector.multi_reduction <add>, %1, %cst [1] : vector<2x4x256xf32> to vector<2x256xf32>
    %3 = vector.shape_cast %2 : vector<2x256xf32> to vector<2x1x256xf32>
    %4 = math.rsqrt %3 : vector<2x1x256xf32>
    %5 = vector.broadcast %4 : vector<2x1x256xf32> to vector<2x4x256xf32>
    %6 = arith.mulf %0, %5 : vector<2x4x256xf32>
    %c0_2 = arith.constant 0 : index
    %c0_3 = arith.constant 0 : index
    %c0_4 = arith.constant 0 : index
    %7 = vector.load %arg3[%c0_2, %c0_3, %c0_4] : memref<2x4x256xf32, #tpu.memory_space<vmem>>, vector<2x4x256xf32>
    tpu.vector_store %arg3[%c0_2, %c0_3, %c0_4], %6 {strides = array<i32>} : memref<2x4x256xf32, #tpu.memory_space<vmem>>, vector<2x4x256xf32>,
    return
  }
  func.func @transform_0(%arg0: i32, %arg1: i32) -> (i32, i32, i32) {
    %c0_i32 = arith.constant 0 : i32
    %c0_i32_0 = arith.constant 0 : i32
    return %arg0, %c0_i32, %arg1 : i32, i32, i32
  }
  func.func @transform_1(%arg0: i32, %arg1: i32) -> (i32, i32, i32) {
    %c0_i32 = arith.constant 0 : i32
    %c0_i32_0 = arith.constant 0 : i32
    return %arg0, %c0_i32, %arg1 : i32, i32, i32
  }
}

</mosaic_0001>

<llo_original>
// kernel: tpu_custom_call.1
$region0: #{tpu_custom_call.1}
  #allocation0 [shape = 'u32[]', space=smem, size = 0x4, offset = 0x4, fixed_abs, tag = 'smem constant byte address 0x4 - core index']
  #allocation1 [shape = 'u32[144,128]{1,0:T(1,128)}', space=vmem, size = 0x12000, scoped, tag = 'internal scratch']
  %s0 = inlined_call_operand.hbm [shape: f32[2,4,256], index: 0, kind: input, shape index: {}]
  %s1 = inlined_call_operand.hbm [shape: f32[2,4,256], index: 1, kind: output, shape index: {}]
  %s2 = sld [smem:[#allocation0]]
  $region18: #{tpu_custom_call.1} parent=0
    _
  %s4 = ssub.s32 1, %s2
  %s5 = scalar_select 0, %s4, %s2
  $region1: #{tpu_custom_call.1} parent=0
    #allocation2 [shape = 'u8[8192]{0}', space=vmem, size = 0x2000, scoped, tag = 'input window, operand 0, single buffered']
    #allocation3 [shape = 's32[1]{0}', space=sflag, size = 0x4, scoped, tag = 'scoped memory for tpu_custom_call.1']
    #allocation4 [shape = 's32[1]{0}', space=sflag, size = 0x4, scoped, tag = 'scoped memory for tpu_custom_call.1']
    #allocation5 [shape = 'u8[8192]{0}', space=vmem, size = 0x2000, scoped, tag = 'output window, operand 0, single buffered']
    %6 = vsyncpa [#allocation3], 0
    %7 = vsyncpa [#allocation4], 0
    // Predicated region
    $region2: #{tpu_custom_call.1} parent=1 // pred_check
      _
    $region3: #{tpu_custom_call.1} parent=1 // pred_check_branch
      %9 = sbr.rel (0) target = $region5
    $region4: #{tpu_custom_call.1} parent=1 // pred_region
      %s11 = ssub.s32 256, 256
      %12 = vsyncadd [#allocation3], %s11
      %s13 = sshll.u32 [#allocation2], 4
      %s14 = int_to_ptr.vmem [resolvable:$true] %s13
      %19 = dma.hbm_to_vmem [thread:$0]  %s0, 256, %s14, [#allocation3], 128, 128, 8
    $region5: #{tpu_custom_call.1} parent=1 // pred_fallthru
      _
    // Predicated region
    $region6: #{tpu_custom_call.1} parent=1 // pred_check
      _
    $region7: #{tpu_custom_call.1} parent=1 // pred_check_branch
      %21 = sbr.rel (0) target = $region9
    $region8: #{tpu_custom_call.1} parent=1 // pred_region
      %22 = dma.done [#allocation3], 256
    $region9: #{tpu_custom_call.1} parent=1 // pred_fallthru
      _
    %v23 = vld [vmem:[#allocation2] sm:$0xff]
    %v24 = vld [vmem:[#allocation2 + $0x8] sm:$0xff]
    %v25 = vmul.f32 %v23, %v23
    %v26 = vmul.f32 %v24, %v24
    %v29 = vcombine.high %v25, %v25
    %v30 = vcombine.high %v26, %v26
    %vm33 = vcmask 1043456
    %v34 = vsel %vm33, %v25, 0.0
    %v35 = vrot.slane %v34, 4
    %v36 = vadd.f32 %v34, %v35
    %v37 = vrot.slane %v36, 2
    %v38 = vadd.f32 %v36, %v37
    %v39 = vrot.slane %v38, 1
    %v40 = vadd.f32 %v38, %v39
    %v41 = vsel %vm33, %v29, 0.0
    %v42 = vrot.slane %v41, 4
    %v43 = vadd.f32 %v41, %v42
    %v44 = vrot.slane %v43, 2
    %v45 = vadd.f32 %v43, %v44
    %v46 = vrot.slane %v45, 1
    %v47 = vadd.f32 %v45, %v46
    %v48 = vsel %vm33, %v26, 0.0
    %v49 = vrot.slane %v48, 4
    %v50 = vadd.f32 %v48, %v49
    %v51 = vrot.slane %v50, 2
    %v52 = vadd.f32 %v50, %v51
    %v53 = vrot.slane %v52, 1
    %v54 = vadd.f32 %v52, %v53
    %v55 = vsel %vm33, %v30, 0.0
    %v56 = vrot.slane %v55, 4
    %v57 = vadd.f32 %v55, %v56
    %v58 = vrot.slane %v57, 2
    %v59 = vadd.f32 %v57, %v58
    %v60 = vrot.slane %v59, 1
    %v61 = vadd.f32 %v59, %v60
    %v62 = vrsqrt.pop %v40
    %v63 = vrsqrt.pop %v47
    %v64 = vrsqrt.pop %v54
    %v65 = vrsqrt.pop %v61
    %v70 = vcombine.low %v62, %v63
    %v71 = vcombine.low %v64, %v65
    %v74 = vmul.f32 %v23, %v70
    %v75 = vmul.f32 %v24, %v71
    %76 = vst [vmem:[#allocation5] sm:$0xff] %v74
    %77 = vst [vmem:[#allocation5 + $0x8] sm:$0xff] %v75
    // Predicated region
    $region10: #{tpu_custom_call.1} parent=1 // pred_check
      _
    $region11: #{tpu_custom_call.1} parent=1 // pred_check_branch
      %79 = sbr.rel (0) target = $region13
    $region12: #{tpu_custom_call.1} parent=1 // pred_region
      %s81 = ssub.s32 256, 256
      %82 = vsyncadd [#allocation4], %s81
      %s83 = sshll.u32 [#allocation5], 4
      %s84 = int_to_ptr.vmem [resolvable:$true] %s83
      %89 = dma.vmem_to_hbm [thread:$0]  %s84, 256, %s1, [#allocation4], 128, 128, 8
    $region13: #{tpu_custom_call.1} parent=1 // pred_fallthru
      _
    // Predicated region
    $region14: #{tpu_custom_call.1} parent=1 // pred_check
      _
    $region15: #{tpu_custom_call.1} parent=1 // pred_check_branch
      %91 = sbr.rel (0) target = $region17
    $region16: #{tpu_custom_call.1} parent=1 // pred_region
      %92 = dma.done [#allocation4], 256
    $region17: #{tpu_custom_call.1} parent=1 // pred_fallthru
      _
    %93 = vsyncpa [#allocation3], 1
    %94 = vsyncpa [#allocation4], 1

</llo_original>
